<compile_context>
chip_gen: v7x
topology: tpu7x:2x2x1
jax: 0.10.0
libtpu: 0.0.40
codegen_flags: <defaults>
</compile_context>

<pallas_src>
import math

import jax
import jax.numpy as jnp
from jax.experimental import pallas as pl
from jax.experimental.pallas import tpu as pltpu

LANE = 128
# Static tile-size menu: avoids a recompile per distinct batch size.
_TB_CHOICES = (64, 256, 1024, 4096)


def _round_up(x, m):
    return (x + m - 1) // m * m


def _pick_tb(batch):
    """Pick a batch tile from the static menu.

    Rule: largest tile that still leaves >= 2 grid blocks (so the second v7x
    TensorCore is used); fall back to the smallest tile for tiny batches.
    """
    bp = _round_up(batch, 16)
    tb = _TB_CHOICES[0]
    for t in _TB_CHOICES:
        if 2 * t <= bp:
            tb = t
    return tb


def qnetwork_kernel(x_ref, w1_ref, b1_ref, w2_ref, b2_ref, w3_ref, b3_ref, out_ref):
    """Fused 3-layer MLP: relu(x@W1+b1) -> relu(.@W2+b2) -> .@W3+b3.

    x arrives as raw f32 (tb, S); the bf16 cast happens here (free on the VPU)
    so the wrapper never runs a separate cast/pad pass over the batch.
    Weights are bf16, biases and accumulation are f32.
    """
    x = x_ref[...].astype(jnp.bfloat16)                                 # (tb, S)
    h1 = jnp.dot(x, w1_ref[...], preferred_element_type=jnp.float32) + b1_ref[...]
    h1 = jnp.maximum(h1, 0.0).astype(jnp.bfloat16)                      # (tb, 128)
    h2 = jnp.dot(h1, w2_ref[...], preferred_element_type=jnp.float32) + b2_ref[...]
    h2 = jnp.maximum(h2, 0.0).astype(jnp.bfloat16)                      # (tb, 128)
    out_ref[...] = (
        jnp.dot(h2, w3_ref[...], preferred_element_type=jnp.float32) + b3_ref[...]
    )                                                                   # (tb, A)


def init_params(key, state_size, action_size, fc1_units=64, fc2_units=64):
    """Init mimicking nn.Linear default: U(-1/sqrt(fan_in), +1/sqrt(fan_in)).

    Weights are stored (in_features, out_features) — the transpose of PyTorch's
    Linear.weight — so the kernel computes x @ W + b directly.
    """
    def linear(key, fan_in, fan_out):
        kw, kb = jax.random.split(key)
        bound = 1.0 / math.sqrt(fan_in)
        w = jax.random.uniform(kw, (fan_in, fan_out), jnp.float32, -bound, bound)
        b = jax.random.uniform(kb, (1, fan_out), jnp.float32, -bound, bound)
        return w, b

    k1, k2, k3 = jax.random.split(key, 3)
    w1, b1 = linear(k1, state_size, fc1_units)
    w2, b2 = linear(k2, fc1_units, fc2_units)
    w3, b3 = linear(k3, fc2_units, action_size)
    return {"w1": w1, "b1": b1, "w2": w2, "b2": b2, "w3": w3, "b3": b3}


def pad_params(params):
    """Pad only the HIDDEN dims to 128 and cast weights to bf16.

    State (8) and action (4) dims are left at their true sizes — they are full
    array dims, so (tb, S)/(tb, A) blocks are legal and no padding bytes move.
    Padded hidden rows/cols/bias lanes are exactly zero, so they contribute
    nothing numerically.
    """
    S, H1 = params["w1"].shape
    H2 = params["w2"].shape[1]
    A = params["w3"].shape[1]
    H1p, H2p = _round_up(H1, LANE), _round_up(H2, LANE)

    def pad2(a, r, c):
        return jnp.pad(a, ((0, r - a.shape[0]), (0, c - a.shape[1])))

    return {
        "w1": pad2(params["w1"], S, H1p).astype(jnp.bfloat16),
        "b1": pad2(params["b1"], 1, H1p).astype(jnp.float32),
        "w2": pad2(params["w2"], H1p, H2p).astype(jnp.bfloat16),
        "b2": pad2(params["b2"], 1, H2p).astype(jnp.float32),
        "w3": pad2(params["w3"], H2p, A).astype(jnp.bfloat16),
        "b3": params["b3"].astype(jnp.float32),
        "state_size": S,
        "action_size": A,
    }


def qnetwork_forward(state, padded_params, tb=None):
    """Run the fused QNetwork forward pass as a single Pallas kernel.

    state: (B, state_size) float32
    padded_params: output of pad_params().
    Returns (B, action_size) float32 action values.
    """
    w1, b1 = padded_params["w1"], padded_params["b1"]
    w2, b2 = padded_params["w2"], padded_params["b2"]
    w3, b3 = padded_params["w3"], padded_params["b3"]
    S = padded_params["state_size"]
    A = padded_params["action_size"]

    B = state.shape[0]
    H1 = w1.shape[1]
    H2 = w2.shape[1]

    # Batch tiling: static tile menu (no per-B recompiles), multiples of 16 for
    # bf16 sublane packing, >= 2 grid blocks when possible for v7x megacore.
    if tb is None:
        tb = _pick_tb(B)
    tb = _round_up(tb, 16)
    Bp = _round_up(B, tb)
    nb = Bp // tb

    # Only batch-dim zero padding (cheap, skipped when already aligned); no lane
    # padding and no dtype cast in the wrapper.
    x = state.astype(jnp.float32)
    if Bp != B:
        x = jnp.pad(x, ((0, Bp - B), (0, 0)))

    # Advisory cost estimate so XLA schedules the custom call sensibly.
    flops = 2 * Bp * (S * H1 + H1 * H2 + H2 * A)
    bytes_accessed = (
        Bp * S * 4                            # state (f32)
        + (S * H1 + H1 * H2 + H2 * A) * 2     # weights (bf16)
        + (H1 + H2 + A) * 4                   # biases (f32)
        + Bp * A * 4                          # output (f32)
    )

    out = pl.pallas_call(
        qnetwork_kernel,
        out_shape=jax.ShapeDtypeStruct((Bp, A), jnp.float32),
        grid=(nb,),
        in_specs=[
            pl.BlockSpec((tb, S), lambda i: (i, 0)),    # state tile, pipelined
            pl.BlockSpec((S, H1), lambda i: (0, 0)),    # weights/biases: resident
            pl.BlockSpec((1, H1), lambda i: (0, 0)),
            pl.BlockSpec((H1, H2), lambda i: (0, 0)),
            pl.BlockSpec((1, H2), lambda i: (0, 0)),
            pl.BlockSpec((H2, A), lambda i: (0, 0)),
            pl.BlockSpec((1, A), lambda i: (0, 0)),
        ],
        out_specs=pl.BlockSpec((tb, A), lambda i: (i, 0)),   # true action width
        compiler_params=pltpu.CompilerParams(
            dimension_semantics=("parallel",),          # megacore sharding on v7x
            vmem_limit_bytes=32 * 1024 * 1024,          # safe on v5e/v6e/v7x
        ),
        cost_estimate=pl.CostEstimate(
            flops=flops, transcendentals=0, bytes_accessed=bytes_accessed
        ),
    )(x, w1, b1, w2, b2, w3, b3)

    return out[:B]


def _ref_forward(state, padded_params):
    """Pure-JAX reference replicating the kernel's exact math (bf16 in, f32 acc)."""
    x = state.astype(jnp.bfloat16)
    h1 = jnp.dot(x, padded_params["w1"],
                 preferred_element_type=jnp.float32) + padded_params["b1"]
    h1 = jnp.maximum(h1, 0.0).astype(jnp.bfloat16)
    h2 = jnp.dot(h1, padded_params["w2"],
                 preferred_element_type=jnp.float32) + padded_params["b2"]
    h2 = jnp.maximum(h2, 0.0).astype(jnp.bfloat16)
    return jnp.dot(h2, padded_params["w3"],
                   preferred_element_type=jnp.float32) + padded_params["b3"]


if __name__ == "__main__":
    key = jax.random.PRNGKey(0)
    k_params, k_s1, k_s2, k_s3 = jax.random.split(key, 4)

    state_size = 8
    action_size = 4

    params = init_params(k_params, state_size, action_size)
    padded = pad_params(params)

    # Case 1: small, sublane-aligned batch (single grid block).
    s1 = jax.random.normal(k_s1, (8, state_size), dtype=jnp.float32)
    o1 = jax.block_until_ready(qnetwork_forward(s1, padded))
    r1 = _ref_forward(s1, padded)
    assert o1.shape == (8, action_size)
    assert jnp.allclose(o1, r1, atol=1e-3, rtol=1e-3)

    # Case 2: batch needing padding/slicing on the batch axis.
    s2 = jax.random.normal(k_s2, (37, state_size), dtype=jnp.float32)
    o2 = jax.block_until_ready(qnetwork_forward(s2, padded))
    r2 = _ref_forward(s2, padded)
    assert o2.shape == (37, action_size)
    assert jnp.allclose(o2, r2, atol=1e-3, rtol=1e-3)

    # Case 3: multi-block batch (exercises the pipelined grid + megacore path).
    s3 = jax.random.normal(k_s3, (520, state_size), dtype=jnp.float32)
    o3 = jax.block_until_ready(qnetwork_forward(s3, padded))
    r3 = _ref_forward(s3, padded)
    assert o3.shape == (520, action_size)
    assert jnp.allclose(o3, r3, atol=1e-3, rtol=1e-3)

    print("KERNEL_OK")
</pallas_src>

<mosaic_0001>
module attributes {stable_mosaic.version = 11 : i64} {
  func.func @qnetwork_kernel(%arg0: i32, %arg1: memref<64x8xf32, #tpu.memory_space<vmem>>, %arg2: memref<8x128xbf16, #tpu.memory_space<vmem>>, %arg3: memref<1x128xf32, #tpu.memory_space<vmem>>, %arg4: memref<128x128xbf16, #tpu.memory_space<vmem>>, %arg5: memref<1x128xf32, #tpu.memory_space<vmem>>, %arg6: memref<128x4xbf16, #tpu.memory_space<vmem>>, %arg7: memref<1x4xf32, #tpu.memory_space<vmem>>, %arg8: memref<64x4xf32, #tpu.memory_space<vmem>>) attributes {dimension_semantics = [#tpu.dimension_semantics<parallel>], iteration_bounds = array<i64: 1>, scalar_prefetch = 0 : i64, scratch_operands = 0 : i64, tpu.core_type = #tpu.core_type<tc>, window_params = [{transform_indices = @transform_0, window_bounds = array<i64: 64, 8>}, {pipeline_mode = #tpu.pipeline_mode<synchronous>, transform_indices = @transform_1, window_bounds = array<i64: 8, 128>}, {pipeline_mode = #tpu.pipeline_mode<synchronous>, transform_indices = @transform_2, window_bounds = array<i64: 1, 128>}, {pipeline_mode = #tpu.pipeline_mode<synchronous>, transform_indices = @transform_3, window_bounds = array<i64: 128, 128>}, {pipeline_mode = #tpu.pipeline_mode<synchronous>, transform_indices = @transform_4, window_bounds = array<i64: 1, 128>}, {pipeline_mode = #tpu.pipeline_mode<synchronous>, transform_indices = @transform_5, window_bounds = array<i64: 128, 4>}, {pipeline_mode = #tpu.pipeline_mode<synchronous>, transform_indices = @transform_6, window_bounds = array<i64: 1, 4>}, {transform_indices = @transform_7, window_bounds = array<i64: 64, 4>}]} {
    %c0 = arith.constant 0 : index
    %c0_0 = arith.constant 0 : index
    %0 = vector.load %arg1[%c0, %c0_0] : memref<64x8xf32, #tpu.memory_space<vmem>>, vector<64x8xf32>
    %1 = arith.truncf %0 : vector<64x8xf32> to vector<64x8xbf16>
    %c0_1 = arith.constant 0 : index
    %c0_2 = arith.constant 0 : index
    %2 = vector.load %arg2[%c0_1, %c0_2] : memref<8x128xbf16, #tpu.memory_space<vmem>>, vector<8x128xbf16>
    %cst = arith.constant dense<0.000000e+00> : vector<64x128xf32>
    %3 = tpu.matmul %1, %2, %cst {dimension_numbers = #tpu.dot_dimension_numbers<[1], [0], [0], [1], [0, 0, 1, 1], [], []>} : vector<64x8xbf16>, vector<8x128xbf16>, vector<64x128xf32> -> vector<64x128xf32>
    %c0_3 = arith.constant 0 : index
    %c0_4 = arith.constant 0 : index
    %4 = vector.load %arg3[%c0_3, %c0_4] : memref<1x128xf32, #tpu.memory_space<vmem>>, vector<1x128xf32>
    %5 = vector.broadcast %4 : vector<1x128xf32> to vector<64x128xf32>
    %6 = arith.addf %3, %5 : vector<64x128xf32>
    %cst_5 = arith.constant 0.000000e+00 : f32
    %7 = vector.broadcast %cst_5 : f32 to vector<64x128xf32>
    %8 = arith.maximumf %6, %7 : vector<64x128xf32>
    %9 = arith.truncf %8 : vector<64x128xf32> to vector<64x128xbf16>
    %c0_6 = arith.constant 0 : index
    %c0_7 = arith.constant 0 : index
    %10 = vector.load %arg4[%c0_6, %c0_7] : memref<128x128xbf16, #tpu.memory_space<vmem>>, vector<128x128xbf16>
    %cst_8 = arith.constant dense<0.000000e+00> : vector<64x128xf32>
    %11 = tpu.matmul %9, %10, %cst_8 {dimension_numbers = #tpu.dot_dimension_numbers<[1], [0], [0], [1], [0, 0, 1, 1], [], []>} : vector<64x128xbf16>, vector<128x128xbf16>, vector<64x128xf32> -> vector<64x128xf32>
    %c0_9 = arith.constant 0 : index
    %c0_10 = arith.constant 0 : index
    %12 = vector.load %arg5[%c0_9, %c0_10] : memref<1x128xf32, #tpu.memory_space<vmem>>, vector<1x128xf32>
    %13 = vector.broadcast %12 : vector<1x128xf32> to vector<64x128xf32>
    %14 = arith.addf %11, %13 : vector<64x128xf32>
    %cst_11 = arith.constant 0.000000e+00 : f32
    %15 = vector.broadcast %cst_11 : f32 to vector<64x128xf32>
    %16 = arith.maximumf %14, %15 : vector<64x128xf32>
    %17 = arith.truncf %16 : vector<64x128xf32> to vector<64x128xbf16>
    %c0_12 = arith.constant 0 : index
    %c0_13 = arith.constant 0 : index
    %18 = vector.load %arg6[%c0_12, %c0_13] : memref<128x4xbf16, #tpu.memory_space<vmem>>, vector<128x4xbf16>
    %cst_14 = arith.constant dense<0.000000e+00> : vector<64x4xf32>
    %19 = tpu.matmul %17, %18, %cst_14 {dimension_numbers = #tpu.dot_dimension_numbers<[1], [0], [0], [1], [0, 0, 1, 1], [], []>} : vector<64x128xbf16>, vector<128x4xbf16>, vector<64x4xf32> -> vector<64x4xf32>
    %c0_15 = arith.constant 0 : index
    %c0_16 = arith.constant 0 : index
    %20 = vector.load %arg7[%c0_15, %c0_16] : memref<1x4xf32, #tpu.memory_space<vmem>>, vector<1x4xf32>
    %21 = vector.broadcast %20 : vector<1x4xf32> to vector<64x4xf32>
    %22 = arith.addf %19, %21 : vector<64x4xf32>
    %c0_17 = arith.constant 0 : index
    %c0_18 = arith.constant 0 : index
    %23 = vector.load %arg8[%c0_17, %c0_18] : memref<64x4xf32, #tpu.memory_space<vmem>>, vector<64x4xf32>
    tpu.vector_store %arg8[%c0_17, %c0_18], %22 {strides = array<i32>} : memref<64x4xf32, #tpu.memory_space<vmem>>, vector<64x4xf32>,
    return
  }
  func.func @transform_0(%arg0: i32) -> (i32, i32) {
    %c0_i32 = arith.constant 0 : i32
    %c0_i32_0 = arith.constant 0 : i32
    return %arg0, %c0_i32 : i32, i32
  }
  func.func @transform_1(%arg0: i32) -> (i32, i32) {
    %c0_i32 = arith.constant 0 : i32
    %c0_i32_0 = arith.constant 0 : i32
    %c0_i32_1 = arith.constant 0 : i32
    return %c0_i32, %c0_i32_0 : i32, i32
  }
  func.func @transform_2(%arg0: i32) -> (i32, i32) {
    %c0_i32 = arith.constant 0 : i32
    %c0_i32_0 = arith.constant 0 : i32
    %c0_i32_1 = arith.constant 0 : i32
    return %c0_i32, %c0_i32_0 : i32, i32
  }
  func.func @transform_3(%arg0: i32) -> (i32, i32) {
    %c0_i32 = arith.constant 0 : i32
    %c0_i32_0 = arith.constant 0 : i32
    %c0_i32_1 = arith.constant 0 : i32
    return %c0_i32, %c0_i32_0 : i32, i32
  }
  func.func @transform_4(%arg0: i32) -> (i32, i32) {
    %c0_i32 = arith.constant 0 : i32
    %c0_i32_0 = arith.constant 0 : i32
    %c0_i32_1 = arith.constant 0 : i32
    return %c0_i32, %c0_i32_0 : i32, i32
  }
  func.func @transform_5(%arg0: i32) -> (i32, i32) {
    %c0_i32 = arith.constant 0 : i32
    %c0_i32_0 = arith.constant 0 : i32
    %c0_i32_1 = arith.constant 0 : i32
    return %c0_i32, %c0_i32_0 : i32, i32
  }
  func.func @transform_6(%arg0: i32) -> (i32, i32) {
    %c0_i32 = arith.constant 0 : i32
    %c0_i32_0 = arith.constant 0 : i32
    %c0_i32_1 = arith.constant 0 : i32
    return %c0_i32, %c0_i32_0 : i32, i32
  }
  func.func @transform_7(%arg0: i32) -> (i32, i32) {
    %c0_i32 = arith.constant 0 : i32
    %c0_i32_0 = arith.constant 0 : i32
    return %arg0, %c0_i32 : i32, i32
  }
}

</mosaic_0001>

<llo_original>
// kernel: tpu_custom_call.1
$region0: #{tpu_custom_call.1}
  #allocation0 [shape = 'u32[]', space=smem, size = 0x4, offset = 0x4, fixed_abs, tag = 'smem constant byte address 0x4 - core index']
  #allocation1 [shape = 'u32[144,128]{1,0:T(1,128)}', space=vmem, size = 0x12000, scoped, tag = 'internal scratch']
  %s0 = inlined_call_operand.vmem [shape: f32[64,8], index: 0, kind: input, shape index: {}]
  %s1 = inlined_call_operand.vmem [shape: bf16[8,128], index: 1, kind: input, shape index: {}]
  %s2 = inlined_call_operand.vmem [shape: f32[1,128], index: 2, kind: input, shape index: {}]
  %s3 = inlined_call_operand.vmem [shape: bf16[128,128], index: 3, kind: input, shape index: {}]
  %s4 = inlined_call_operand.vmem [shape: f32[1,128], index: 4, kind: input, shape index: {}]
  %s5 = inlined_call_operand.vmem [shape: bf16[128,4], index: 5, kind: input, shape index: {}]
  %s6 = inlined_call_operand.vmem [shape: f32[1,4], index: 6, kind: input, shape index: {}]
  %s7 = inlined_call_operand.vmem [shape: f32[64,4], index: 7, kind: output, shape index: {}]
  %s8 = sld [smem:[#allocation0]]
  $region38: #{tpu_custom_call.1} parent=0
    _
  %s10 = ssub.s32 1, %s8
  %s11 = scalar_select 0, %s10, %s8
  // Predicated region
  $region2: #{tpu_custom_call.1} parent=0 // pred_check
    _
  $region3: #{tpu_custom_call.1} parent=0 // pred_check_branch
    %13 = sbr.rel (0) target = $region5
  $region4: #{tpu_custom_call.1} parent=0 // pred_region
    _
  $region5: #{tpu_custom_call.1} parent=0 // pred_fallthru
    _
  // Predicated region
  $region6: #{tpu_custom_call.1} parent=0 // pred_check
    _
  $region7: #{tpu_custom_call.1} parent=0 // pred_check_branch
    %15 = sbr.rel (0) target = $region9
  $region8: #{tpu_custom_call.1} parent=0 // pred_region
    _
  $region9: #{tpu_custom_call.1} parent=0 // pred_fallthru
    _
  // Predicated region
  $region10: #{tpu_custom_call.1} parent=0 // pred_check
    _
  $region11: #{tpu_custom_call.1} parent=0 // pred_check_branch
    %17 = sbr.rel (0) target = $region13
  $region12: #{tpu_custom_call.1} parent=0 // pred_region
    _
  $region13: #{tpu_custom_call.1} parent=0 // pred_fallthru
    _
  // Predicated region
  $region14: #{tpu_custom_call.1} parent=0 // pred_check
    _
  $region15: #{tpu_custom_call.1} parent=0 // pred_check_branch
    %19 = sbr.rel (0) target = $region17
  $region16: #{tpu_custom_call.1} parent=0 // pred_region
    _
  $region17: #{tpu_custom_call.1} parent=0 // pred_fallthru
    _
  // Predicated region
  $region18: #{tpu_custom_call.1} parent=0 // pred_check
    _
  $region19: #{tpu_custom_call.1} parent=0 // pred_check_branch
    %21 = sbr.rel (0) target = $region21
  $region20: #{tpu_custom_call.1} parent=0 // pred_region
    _
  $region21: #{tpu_custom_call.1} parent=0 // pred_fallthru
    _
  // Predicated region
  $region22: #{tpu_custom_call.1} parent=0 // pred_check
    _
  $region23: #{tpu_custom_call.1} parent=0 // pred_check_branch
    %23 = sbr.rel (0) target = $region25
  $region24: #{tpu_custom_call.1} parent=0 // pred_region
    _
  $region25: #{tpu_custom_call.1} parent=0 // pred_fallthru
    _
  // Predicated region
  $region26: #{tpu_custom_call.1} parent=0 // pred_check
    _
  $region27: #{tpu_custom_call.1} parent=0 // pred_check_branch
    %25 = sbr.rel (0) target = $region29
  $region28: #{tpu_custom_call.1} parent=0 // pred_region
    _
  $region29: #{tpu_custom_call.1} parent=0 // pred_fallthru
    _
  %v27 = vld [vmem:[%s0] sm:$0xff]
  %v28 = vld [vmem:[%s0 + $0x8] sm:$0xff]
  %v29 = vld [vmem:[%s0 + $0x10] sm:$0xff]
  %v30 = vld [vmem:[%s0 + $0x18] sm:$0xff]
  %v31 = vld [vmem:[%s0 + $0x20] sm:$0xff]
  %v32 = vld [vmem:[%s0 + $0x28] sm:$0xff]
  %v33 = vld [vmem:[%s0 + $0x30] sm:$0xff]
  %v34 = vld [vmem:[%s0 + $0x38] sm:$0xff]
  %v35 = vpack.c.bf16 %v28, %v27
  %v36 = vpack.c.bf16 %v30, %v29
  %v37 = vpack.c.bf16 %v32, %v31
  %v38 = vpack.c.bf16 %v34, %v33
  %v39 = vld [vmem:[%s1] sm:$0xf]
  %v40 = vld [vmem:[%s2] sm:$0x1]
  %v42 = vlaneseq
  %v43 = vshrl.u32 %v42, 7
  %v44 = vsub.s32 0, %v43
  %v45 = vrot.slane %v40, %v44
  %vm47 = vcmask 64512
  %v49 = vsel %vm47, %v35, 0
  %v52 = vsel %vm47, %v36, 0
  %v55 = vsel %vm47, %v37, 0
  %v58 = vsel %vm47, %v38, 0
  %vm60 = vcmask 1043456
  %v62 = vsel %vm60, %v39, 0
  %64 = vmatprep.subr.bf16.mxu0 0
  %65 = vmatpush1.bf16.msra.mxu0 %v62
  %66 = vmatprep.subr.bf16.mxu0 0
  %67 = vmatpush1.bf16.msra.mxu0 0
  %68 = vmatprep.subr.bf16.mxu0 0
  %69 = vmatpush1.bf16.msra.mxu0 0
  %70 = vmatprep.subr.bf16.mxu0 0
  %71 = vmatpush1.bf16.msra.mxu0 0
  %72 = vmatprep.subr.bf16.mxu0 0
  %73 = vmatpush1.bf16.msra.mxu0 0
  %74 = vmatprep.subr.bf16.mxu0 0
  %75 = vmatpush1.bf16.msra.mxu0 0
  %76 = vmatprep.subr.bf16.mxu0 0
  %77 = vmatpush1.bf16.msra.mxu0 0
  %78 = vmatprep.subr.bf16.mxu0 0
  %79 = vmatpush1.bf16.msra.mxu0 0
  %80 = vmatprep.subr.bf16.mxu0 0
  %81 = vmatpush1.bf16.msra.mxu0 0
  %82 = vmatprep.subr.bf16.mxu0 0
  %83 = vmatpush1.bf16.msra.mxu0 0
  %84 = vmatprep.subr.bf16.mxu0 0
  %85 = vmatpush1.bf16.msra.mxu0 0
  %86 = vmatprep.subr.bf16.mxu0 0
  %87 = vmatpush1.bf16.msra.mxu0 0
  %88 = vmatprep.subr.bf16.mxu0 0
  %89 = vmatpush1.bf16.msra.mxu0 0
  %90 = vmatprep.subr.bf16.mxu0 0
  %91 = vmatpush1.bf16.msra.mxu0 0
  %92 = vmatprep.subr.bf16.mxu0 0
  %93 = vmatpush1.bf16.msra.mxu0 0
  %94 = vmatprep.subr.bf16.mxu0 0
  %95 = vmatpush1.bf16.msra.mxu0 0
  %96 = vmatprep.mubr.bf16.mxu0 0
  %97 = vmatmul.mubr.bf16.gmra.mrb[0].mxu0 %v49
  %v98 = vpop.f32.mrb[0].mxu0
  %v99 = vadd.f32 %v45, %v98
  %v100 = vpop.f32.mrb[0].mxu0
  %v101 = vpop.f32.mrb[0].mxu0
  %v102 = vadd.f32 %v45, %v101
  %v103 = vpop.f32.mrb[0].mxu0
  %104 = vmatprep.mubr.bf16.mxu0 0
  %105 = vmatmul.mubr.bf16.gmra.mrb[0].mxu0 %v52
  %v106 = vpop.f32.mrb[0].mxu0
  %v107 = vadd.f32 %v45, %v106
  %v108 = vpop.f32.mrb[0].mxu0
  %v109 = vpop.f32.mrb[0].mxu0
  %v110 = vadd.f32 %v45, %v109
  %v111 = vpop.f32.mrb[0].mxu0
  %112 = vmatprep.mubr.bf16.mxu0 0
  %113 = vmatmul.mubr.bf16.gmra.mrb[0].mxu0 %v55
  %v114 = vpop.f32.mrb[0].mxu0
  %v115 = vadd.f32 %v45, %v114
  %v116 = vpop.f32.mrb[0].mxu0
  %v117 = vpop.f32.mrb[0].mxu0
  %v118 = vadd.f32 %v45, %v117
  %v119 = vpop.f32.mrb[0].mxu0
  %120 = vmatprep.mubr.bf16.mxu0 0
  %121 = vmatmul.mubr.bf16.gmra.mrb[0].mxu0 %v58
  %v122 = vpop.f32.mrb[0].mxu0
  %v123 = vadd.f32 %v45, %v122
  %v124 = vpop.f32.mrb[0].mxu0
  %v125 = vpop.f32.mrb[0].mxu0
  %v126 = vadd.f32 %v45, %v125
  %v127 = vpop.f32.mrb[0].mxu0
  %128 = vdwg.mxu0
  %v129 = vmax.f32 %v99, 0.0
  %v130 = vmax.f32 %v102, 0.0
  %v131 = vmax.f32 %v107, 0.0
  %v132 = vmax.f32 %v110, 0.0
  %v133 = vmax.f32 %v115, 0.0
  %v134 = vmax.f32 %v118, 0.0
  %v135 = vmax.f32 %v123, 0.0
  %v136 = vmax.f32 %v126, 0.0
  %v137 = vpack.c.bf16 %v130, %v129
  %v138 = vpack.c.bf16 %v132, %v131
  %v139 = vpack.c.bf16 %v134, %v133
  %v140 = vpack.c.bf16 %v136, %v135
  %v141 = vld [vmem:[%s3] sm:$0xf]
  %v142 = vld [vmem:[%s3 + $0x4] sm:$0xf]
  %v143 = vld [vmem:[%s3 + $0x8] sm:$0xf]
  %v144 = vld [vmem:[%s3 + $0xc] sm:$0xf]
  %v145 = vld [vmem:[%s3 + $0x10] sm:$0xf]
  %v146 = vld [vmem:[%s3 + $0x14] sm:$0xf]
  %v147 = vld [vmem:[%s3 + $0x18] sm:$0xf]
  %v148 = vld [vmem:[%s3 + $0x1c] sm:$0xf]
  %v149 = vld [vmem:[%s3 + $0x20] sm:$0xf]
  %v150 = vld [vmem:[%s3 + $0x24] sm:$0xf]
  %v151 = vld [vmem:[%s3 + $0x28] sm:$0xf]
  %v152 = vld [vmem:[%s3 + $0x2c] sm:$0xf]
  %v153 = vld [vmem:[%s3 + $0x30] sm:$0xf]
  %v154 = vld [vmem:[%s3 + $0x34] sm:$0xf]
  %v155 = vld [vmem:[%s3 + $0x38] sm:$0xf]
  %v156 = vld [vmem:[%s3 + $0x3c] sm:$0xf]
  %v157 = vld [vmem:[%s4] sm:$0x1]
  %v159 = vlaneseq
  %v160 = vshrl.u32 %v159, 7
  %v161 = vsub.s32 0, %v160
  %v162 = vrot.slane %v157, %v161
  %v180 = vunpack.c.l.b16 %v141
  %v181 = vunpack.c.l.b16 %v142
  %v182 = vunpack.c.l.b16 %v143
  %v183 = vunpack.c.l.b16 %v144
  %v184 = vunpack.c.l.b16 %v145
  %v185 = vunpack.c.l.b16 %v146
  %v186 = vunpack.c.l.b16 %v147
  %v187 = vunpack.c.l.b16 %v148
  %v188 = vunpack.c.l.b16 %v149
  %v189 = vunpack.c.l.b16 %v150
  %v190 = vunpack.c.l.b16 %v151
  %v191 = vunpack.c.l.b16 %v152
  %v192 = vunpack.c.l.b16 %v153
  %v193 = vunpack.c.l.b16 %v154
  %v194 = vunpack.c.l.b16 %v155
  %v195 = vunpack.c.l.b16 %v156
  %v196 = vpack.c.b16 %v181, %v180
  %v197 = vpack.c.b16 %v183, %v182
  %v198 = vpack.c.b16 %v185, %v184
  %v199 = vpack.c.b16 %v187, %v186
  %v200 = vpack.c.b16 %v189, %v188
  %v201 = vpack.c.b16 %v191, %v190
  %v202 = vpack.c.b16 %v193, %v192
  %v203 = vpack.c.b16 %v195, %v194
  %212 = vmatprep.subr.bf16.mxu0 0
  %213 = vmatpush1.bf16.msra.mxu0 %v196
  %214 = vmatprep.subr.bf16.mxu0 0
  %215 = vmatpush1.bf16.msra.mxu0 %v197
  %216 = vmatprep.subr.bf16.mxu0 0
  %217 = vmatpush1.bf16.msra.mxu0 %v198
  %218 = vmatprep.subr.bf16.mxu0 0
  %219 = vmatpush1.bf16.msra.mxu0 %v199
  %220 = vmatprep.subr.bf16.mxu0 0
  %221 = vmatpush1.bf16.msra.mxu0 %v200
  %222 = vmatprep.subr.bf16.mxu0 0
  %223 = vmatpush1.bf16.msra.mxu0 %v201
  %224 = vmatprep.subr.bf16.mxu0 0
  %225 = vmatpush1.bf16.msra.mxu0 %v202
  %226 = vmatprep.subr.bf16.mxu0 0
  %227 = vmatpush1.bf16.msra.mxu0 %v203
  %228 = vmatprep.subr.bf16.mxu0 0
  %229 = vmatpush1.bf16.msra.mxu0 0
  %230 = vmatprep.subr.bf16.mxu0 0
  %231 = vmatpush1.bf16.msra.mxu0 0
  %232 = vmatprep.subr.bf16.mxu0 0
  %233 = vmatpush1.bf16.msra.mxu0 0
  %234 = vmatprep.subr.bf16.mxu0 0
  %235 = vmatpush1.bf16.msra.mxu0 0
  %236 = vmatprep.subr.bf16.mxu0 0
  %237 = vmatpush1.bf16.msra.mxu0 0
  %238 = vmatprep.subr.bf16.mxu0 0
  %239 = vmatpush1.bf16.msra.mxu0 0
  %240 = vmatprep.subr.bf16.mxu0 0
  %241 = vmatpush1.bf16.msra.mxu0 0
  %242 = vmatprep.subr.bf16.mxu0 0
  %243 = vmatpush1.bf16.msra.mxu0 0
  %244 = vmatprep.mubr.bf16.mxu0 0
  %245 = vmatmul.mubr.bf16.gmra.mrb[0].mxu0 %v137
  %v246 = vpop.f32.mrb[0].mxu0
  %v247 = vadd.f32 %v162, %v246
  %v248 = vpop.f32.mrb[0].mxu0
  %v249 = vpop.f32.mrb[0].mxu0
  %v250 = vadd.f32 %v162, %v249
  %v251 = vpop.f32.mrb[0].mxu0
  %252 = vmatprep.mubr.bf16.mxu0 0
  %253 = vmatmul.mubr.bf16.gmra.mrb[0].mxu0 %v138
  %v254 = vpop.f32.mrb[0].mxu0
  %v255 = vadd.f32 %v162, %v254
  %v256 = vpop.f32.mrb[0].mxu0
  %v257 = vpop.f32.mrb[0].mxu0
  %v258 = vadd.f32 %v162, %v257
  %v259 = vpop.f32.mrb[0].mxu0
  %260 = vmatprep.mubr.bf16.mxu0 0
  %261 = vmatmul.mubr.bf16.gmra.mrb[0].mxu0 %v139
  %v262 = vpop.f32.mrb[0].mxu0
  %v263 = vadd.f32 %v162, %v262
  %v264 = vpop.f32.mrb[0].mxu0
  %v265 = vpop.f32.mrb[0].mxu0
  %v266 = vadd.f32 %v162, %v265
  %v267 = vpop.f32.mrb[0].mxu0
  %268 = vmatprep.mubr.bf16.mxu0 0
  %269 = vmatmul.mubr.bf16.gmra.mrb[0].mxu0 %v140
  %v270 = vpop.f32.mrb[0].mxu0
  %v271 = vadd.f32 %v162, %v270
  %v272 = vpop.f32.mrb[0].mxu0
  %v273 = vpop.f32.mrb[0].mxu0
  %v274 = vadd.f32 %v162, %v273
  %v275 = vpop.f32.mrb[0].mxu0
  %276 = vdwg.mxu0
  %v277 = vmax.f32 %v247, 0.0
  %v278 = vmax.f32 %v250, 0.0
  %v279 = vmax.f32 %v255, 0.0
  %v280 = vmax.f32 %v258, 0.0
  %v281 = vmax.f32 %v263, 0.0
  %v282 = vmax.f32 %v266, 0.0
  %v283 = vmax.f32 %v271, 0.0
  %v284 = vmax.f32 %v274, 0.0
  %v285 = vpack.c.bf16 %v278, %v277
  %v286 = vpack.c.bf16 %v280, %v279
  %v287 = vpack.c.bf16 %v282, %v281
  %v288 = vpack.c.bf16 %v284, %v283
  %v289 = vld [vmem:[%s5] sm:$0xf]
  %v290 = vld [vmem:[%s5 + $0x4] sm:$0xf]
  %v291 = vld [vmem:[%s5 + $0x8] sm:$0xf]
  %v292 = vld [vmem:[%s5 + $0xc] sm:$0xf]
  %v293 = vld [vmem:[%s5 + $0x10] sm:$0xf]
  %v294 = vld [vmem:[%s5 + $0x14] sm:$0xf]
  %v295 = vld [vmem:[%s5 + $0x18] sm:$0xf]
  %v296 = vld [vmem:[%s5 + $0x1c] sm:$0xf]
  %v297 = vld [vmem:[%s5 + $0x20] sm:$0xf]
  %v298 = vld [vmem:[%s5 + $0x24] sm:$0xf]
  %v299 = vld [vmem:[%s5 + $0x28] sm:$0xf]
  %v300 = vld [vmem:[%s5 + $0x2c] sm:$0xf]
  %v301 = vld [vmem:[%s5 + $0x30] sm:$0xf]
  %v302 = vld [vmem:[%s5 + $0x34] sm:$0xf]
  %v303 = vld [vmem:[%s5 + $0x38] sm:$0xf]
  %v304 = vld [vmem:[%s5 + $0x3c] sm:$0xf]
  %v305 = vld [vmem:[%s6] sm:$0x1]
  %v307 = vlaneseq
  %v308 = vshrl.u32 %v307, 7
  %v309 = vsub.s32 0, %v308
  %v310 = vrot.slane %v305, %v309
  %v328 = vunpack.c.l.b16 %v289
  %v329 = vunpack.c.l.b16 %v290
  %v330 = vunpack.c.l.b16 %v291
  %v331 = vunpack.c.l.b16 %v292
  %v332 = vunpack.c.l.b16 %v293
  %v333 = vunpack.c.l.b16 %v294
  %v334 = vunpack.c.l.b16 %v295
  %v335 = vunpack.c.l.b16 %v296
  %v336 = vunpack.c.l.b16 %v297
  %v337 = vunpack.c.l.b16 %v298
  %v338 = vunpack.c.l.b16 %v299
  %v339 = vunpack.c.l.b16 %v300
  %v340 = vunpack.c.l.b16 %v301
  %v341 = vunpack.c.l.b16 %v302
  %v342 = vunpack.c.l.b16 %v303
  %v343 = vunpack.c.l.b16 %v304
  %v344 = vpack.c.b16 %v329, %v328
  %v345 = vpack.c.b16 %v331, %v330
  %v346 = vpack.c.b16 %v333, %v332
  %v347 = vpack.c.b16 %v335, %v334
  %v348 = vpack.c.b16 %v337, %v336
  %v349 = vpack.c.b16 %v339, %v338
  %v350 = vpack.c.b16 %v341, %v340
  %v351 = vpack.c.b16 %v343, %v342
  %360 = vmatprep.subr.bf16.mxu0 0
  %361 = vmatpush1.bf16.msra.mxu0 %v344
  %362 = vmatprep.subr.bf16.mxu0 0
  %363 = vmatpush1.bf16.msra.mxu0 %v345
  %364 = vmatprep.subr.bf16.mxu0 0
  %365 = vmatpush1.bf16.msra.mxu0 %v346
  %366 = vmatprep.subr.bf16.mxu0 0
  %367 = vmatpush1.bf16.msra.mxu0 %v347
  %368 = vmatprep.subr.bf16.mxu0 0
  %369 = vmatpush1.bf16.msra.mxu0 %v348
  %370 = vmatprep.subr.bf16.mxu0 0
  %371 = vmatpush1.bf16.msra.mxu0 %v349
  %372 = vmatprep.subr.bf16.mxu0 0
  %373 = vmatpush1.bf16.msra.mxu0 %v350
  %374 = vmatprep.subr.bf16.mxu0 0
  %375 = vmatpush1.bf16.msra.mxu0 %v351
  %376 = vmatprep.subr.bf16.mxu0 0
  %377 = vmatpush1.bf16.msra.mxu0 0
  %378 = vmatprep.subr.bf16.mxu0 0
  %379 = vmatpush1.bf16.msra.mxu0 0
  %380 = vmatprep.subr.bf16.mxu0 0
  %381 = vmatpush1.bf16.msra.mxu0 0
  %382 = vmatprep.subr.bf16.mxu0 0
  %383 = vmatpush1.bf16.msra.mxu0 0
  %384 = vmatprep.subr.bf16.mxu0 0
  %385 = vmatpush1.bf16.msra.mxu0 0
  %386 = vmatprep.subr.bf16.mxu0 0
  %387 = vmatpush1.bf16.msra.mxu0 0
  %388 = vmatprep.subr.bf16.mxu0 0
  %389 = vmatpush1.bf16.msra.mxu0 0
  %390 = vmatprep.subr.bf16.mxu0 0
  %391 = vmatpush1.bf16.msra.mxu0 0
  %392 = vmatprep.mubr.bf16.mxu0 0
  %393 = vmatmul.mubr.bf16.gmra.mrb[0].mxu0 %v285
  %v394 = vpop.f32.mrb[0].mxu0
  %v395 = vadd.f32 %v310, %v394
  %v396 = vpop.f32.mrb[0].mxu0
  %v397 = vpop.f32.mrb[0].mxu0
  %v398 = vadd.f32 %v310, %v397
  %v399 = vpop.f32.mrb[0].mxu0
  %400 = vmatprep.mubr.bf16.mxu0 0
  %401 = vmatmul.mubr.bf16.gmra.mrb[0].mxu0 %v286
  %v402 = vpop.f32.mrb[0].mxu0
  %v403 = vadd.f32 %v310, %v402
  %v404 = vpop.f32.mrb[0].mxu0
  %v405 = vpop.f32.mrb[0].mxu0
  %v406 = vadd.f32 %v310, %v405
  %v407 = vpop.f32.mrb[0].mxu0
  %408 = vmatprep.mubr.bf16.mxu0 0
  %409 = vmatmul.mubr.bf16.gmra.mrb[0].mxu0 %v287
  %v410 = vpop.f32.mrb[0].mxu0
  %v411 = vadd.f32 %v310, %v410
  %v412 = vpop.f32.mrb[0].mxu0
  %v413 = vpop.f32.mrb[0].mxu0
  %v414 = vadd.f32 %v310, %v413
  %v415 = vpop.f32.mrb[0].mxu0
  %416 = vmatprep.mubr.bf16.mxu0 0
  %417 = vmatmul.mubr.bf16.gmra.mrb[0].mxu0 %v288
  %v418 = vpop.f32.mrb[0].mxu0
  %v419 = vadd.f32 %v310, %v418
  %v420 = vpop.f32.mrb[0].mxu0
  %v421 = vpop.f32.mrb[0].mxu0
  %v422 = vadd.f32 %v310, %v421
  %v423 = vpop.f32.mrb[0].mxu0
  %424 = vdwg.mxu0
  %vm425 = vcmask 31744
  %426 = vst.msk [vmem:[%s7] sm:$0xff] %vm425, %v395
  %427 = vst.msk [vmem:[%s7 + $0x8] sm:$0xff] %vm425, %v398
  %428 = vst.msk [vmem:[%s7 + $0x10] sm:$0xff] %vm425, %v403
  %429 = vst.msk [vmem:[%s7 + $0x18] sm:$0xff] %vm425, %v406
  %430 = vst.msk [vmem:[%s7 + $0x20] sm:$0xff] %vm425, %v411
  %431 = vst.msk [vmem:[%s7 + $0x28] sm:$0xff] %vm425, %v414
  %432 = vst.msk [vmem:[%s7 + $0x30] sm:$0xff] %vm425, %v419
  %433 = vst.msk [vmem:[%s7 + $0x38] sm:$0xff] %vm425, %v422
  // Predicated region
  $region30: #{tpu_custom_call.1} parent=0 // pred_check
    _
  $region31: #{tpu_custom_call.1} parent=0 // pred_check_branch
    %435 = sbr.rel (0) target = $region33
  $region32: #{tpu_custom_call.1} parent=0 // pred_region
    _
  $region33: #{tpu_custom_call.1} parent=0 // pred_fallthru
    _
  // Predicated region
  $region34: #{tpu_custom_call.1} parent=0 // pred_check
    _
  $region35: #{tpu_custom_call.1} parent=0 // pred_check_branch
    %437 = sbr.rel (0) target = $region37
  $region36: #{tpu_custom_call.1} parent=0 // pred_region
    _
  $region37: #{tpu_custom_call.1} parent=0 // pred_fallthru
    _

</llo_original>
